<compile_context>
chip_gen: v6e
topology: v6e:2x2x1
jax: 0.10.0
libtpu: 0.0.40
codegen_flags: <defaults>
</compile_context>

<pallas_src>
import functools
import math

import jax
import jax.numpy as jnp
from jax.experimental import pallas as pl
from jax.experimental.pallas import tpu as pltpu


def _cdiv(a, b):
    return -(-a // b)


def _lcm(a, b):
    return a * b // math.gcd(a, b)


def _shift_lanes_zero_fill(xv, shift):
    """y[:, j] = xv[:, j + shift], zero where j + shift is out of range.

    Value-level lane shift (slice + concat => vreg lane shuffle on the XLU),
    equivalent to pltpu.roll + iota mask but valid for any T and needing no
    wrap-around mask. Caller guarantees 0 < |shift| < T.
    """
    rows, _ = xv.shape
    fill = jnp.zeros((rows, abs(shift)), xv.dtype)
    if shift > 0:
        return jnp.concatenate([xv[:, shift:], fill], axis=1)
    return jnp.concatenate([fill, xv[:, :shift]], axis=1)


def _lconv_kernel(x_ref, w_ref, o_ref, *, kernel_size, padding, has_bias):
    # x_ref : (rows, T)        input rows (row = flattened (batch, channel))
    # w_ref : (rows, K[+1])    per-row taps (+ optional bias column)
    # o_ref : (rows, T)        output rows
    f32 = jnp.float32
    t = x_ref.shape[-1]
    xv = x_ref[...].astype(f32)                    # x loaded from VMEM once
    wv = w_ref[...].astype(f32)                    # taps/bias loaded once
    kc = padding                                   # centre tap: shift == 0

    acc = wv[:, kc:kc + 1] * xv                    # f32 accumulator, no RMW
    if has_bias:
        acc = acc + wv[:, kernel_size:kernel_size + 1]

    for k in range(kernel_size):
        if k == kc:
            continue
        s = k - padding                            # static lane shift
        if abs(s) >= t:
            continue                               # tap lies wholly in pad
        acc = acc + wv[:, k:k + 1] * _shift_lanes_zero_fill(xv, s)

    o_ref[...] = acc.astype(o_ref.dtype)           # single lane-dense store


def _sublane_granule(dtype):
    # Sub-32-bit dtypes pack along sublanes: 8 for 4B, 16 for 2B, 32 for 1B.
    return {4: 8, 2: 16, 1: 32}.get(jnp.dtype(dtype).itemsize, 8)


def _hw_budgets():
    """(target_block_bytes, vmem_limit_bytes), tuned per TPU generation:
    v7x (64 MiB VMEM/TC): ~3 MiB blocks, <=40 MiB scoped limit;
    v5e/v6e (128 MiB VMEM): ~6 MiB blocks, 64 MiB limit."""
    vmem_cap = None
    try:
        vmem_cap = int(pltpu.get_tpu_info().vmem_capacity_bytes)
    except Exception:
        vmem_cap = None
    if vmem_cap is not None and vmem_cap > 64 * 1024 * 1024:
        return 6 * 1024 * 1024, 64 * 1024 * 1024
    return 3 * 1024 * 1024, 40 * 1024 * 1024


def _choose_row_tile(n_rows, n_channels, t, itemsize, granule,
                     target_block_bytes):
    """Rows per block: a multiple of lcm(C, sublane granule) (so one weight
    block serves every grid step and sublane packing stays dense), sized for
    ~target_block_bytes per (rows, T) block, preferring an even number >= 2
    of grid steps so the parallel row axis splits across v7x's two TCs."""
    unit = _lcm(n_channels, granule)
    if unit >= n_rows:
        return n_rows                              # single full-extent block
    total_units = _cdiv(n_rows, unit)
    by_vmem = max(1, target_block_bytes // max(1, unit * t * itemsize))
    units = min(by_vmem, total_units)
    steps = _cdiv(total_units, units)
    if steps == 1 and total_units >= 2:
        units = _cdiv(total_units, 2)
    elif steps > 1 and steps % 2 == 1:
        units = _cdiv(total_units, steps + 1)
    tile = units * unit
    return n_rows if tile >= n_rows else tile


def lightweight_conv1d(x, weight, bias=None, *, padding=0, num_heads=1,
                       weight_softmax=False):
    """x: (B, C, T); weight: (H, 1, K); bias: (C,) or None."""
    B, C, T = x.shape
    H, _, K = weight.shape
    assert H == num_heads and C % H == 0
    # The PyTorch module's output.view(B, C, T) requires 'same'-length output.
    assert T + 2 * padding - (K - 1) == T, "module requires 2*padding == K-1"

    w = weight.astype(jnp.float32)
    if weight_softmax:
        w = jax.nn.softmax(w, axis=-1)             # softmax in f32
    # FairseqDropout in eval mode == identity.

    # Per-channel taps (channel c uses head c % H); fold bias as extra column.
    head_idx = jnp.arange(C) % H
    w_chan = w[:, 0, :][head_idx]                                   # (C, K)
    has_bias = bias is not None
    if has_bias:
        w_chan = jnp.concatenate(
            [w_chan, bias.astype(jnp.float32).reshape(C, 1)], axis=1)
    Kw = K + (1 if has_bias else 0)

    R = B * C
    x2d = x.reshape(R, T)                                           # free view

    target_block_bytes, vmem_limit = _hw_budgets()
    granule = _sublane_granule(x.dtype)
    row_tile = _choose_row_tile(R, C, T, jnp.dtype(x.dtype).itemsize, granule,
                                target_block_bytes)

    # One weight block of row_tile rows serves every grid step: row_tile % C
    # == 0, so block-row i is always channel i % C. Its index_map is constant
    # so it is fetched once and stays resident across the grid.
    w_block = jnp.tile(w_chan, (row_tile // C, 1))                  # (row_tile, Kw)

    grid = (pl.cdiv(R, row_tile),)
    kernel = functools.partial(_lconv_kernel, kernel_size=K, padding=padding,
                               has_bias=has_bias)

    out2d = pl.pallas_call(
        kernel,
        out_shape=jax.ShapeDtypeStruct((R, T), x.dtype),
        grid=grid,
        in_specs=[
            pl.BlockSpec((row_tile, T), lambda r: (r, 0)),
            pl.BlockSpec((row_tile, Kw), lambda r: (0, 0)),
        ],
        out_specs=pl.BlockSpec((row_tile, T), lambda r: (r, 0)),
        compiler_params=pltpu.CompilerParams(
            dimension_semantics=("parallel",),
            vmem_limit_bytes=vmem_limit),
    )(x2d, w_block)
    return out2d.reshape(B, C, T)


def _reference(x, weight, bias, padding, num_heads, weight_softmax):
    """Plain-JAX reference mirroring the PyTorch forward."""
    B, C, T = x.shape
    H, _, K = weight.shape
    w = weight.astype(jnp.float32)
    if weight_softmax:
        w = jax.nn.softmax(w, axis=-1)
    head_idx = jnp.arange(C) % H
    w_c = w[:, 0, :][head_idx]                                       # (C, K)
    x_pad = jnp.pad(x, ((0, 0), (0, 0), (padding, padding)))
    out = jnp.zeros((B, C, T), x.dtype)
    for k in range(K):
        out = out + w_c[None, :, k:k + 1] * x_pad[:, :, k:k + T]
    if bias is not None:
        out = out + bias.reshape(1, -1, 1)
    return out


if __name__ == "__main__":
    key = jax.random.PRNGKey(0)

    def run_case(B, C, T, H, K, padding, weight_softmax, use_bias, case_key):
        kx, kw, kb = jax.random.split(case_key, 3)
        # xavier_uniform-like init (gain('linear') == 1), torch 3-D convention.
        fan_in, fan_out = 1 * K, H * K
        bound = math.sqrt(6.0 / (fan_in + fan_out))
        weight = jax.random.uniform(kw, (H, 1, K), jnp.float32, -bound, bound)
        bias = (0.1 * jax.random.normal(kb, (C,), jnp.float32)
                if use_bias else None)
        x = jax.random.normal(kx, (B, C, T), jnp.float32)

        out = lightweight_conv1d(x, weight, bias, padding=padding,
                                 num_heads=H, weight_softmax=weight_softmax)
        out = jax.block_until_ready(out)

        ref = _reference(x, weight, bias, padding, H, weight_softmax)
        assert out.shape == (B, C, T)
        err = jnp.max(jnp.abs(out - ref))
        assert jnp.allclose(out, ref, atol=1e-5, rtol=1e-5), f"max err {err}"

    k1, k2, k3 = jax.random.split(key, 3)
    # Case 1: module-like config (softmax + bias); 2 grid steps of 8 rows.
    run_case(B=2, C=8, T=16, H=4, K=3, padding=1, weight_softmax=True,
             use_bias=True, case_key=k1)
    # Case 2: K=5, no bias/softmax, single full-extent block, odd T.
    run_case(B=2, C=10, T=48, H=5, K=5, padding=2, weight_softmax=False,
             use_bias=False, case_key=k2)
    # Case 3: K=7, lane-dense T=128, partial last row block (48 rows, tile 32),
    # exercises the constant-index weight block across a multi-step grid.
    run_case(B=3, C=16, T=128, H=4, K=7, padding=3, weight_softmax=True,
             use_bias=True, case_key=k3)

    print("KERNEL_OK")
</pallas_src>

<mosaic_0001>
module attributes {stable_mosaic.version = 11 : i64} {
  func.func @_lconv_kernel(%arg0: i32, %arg1: memref<8x16xf32, #tpu.memory_space<vmem>>, %arg2: memref<8x4xf32, #tpu.memory_space<vmem>>, %arg3: memref<8x16xf32, #tpu.memory_space<vmem>>) attributes {dimension_semantics = [#tpu.dimension_semantics<parallel>], iteration_bounds = array<i64: 2>, scalar_prefetch = 0 : i64, scratch_operands = 0 : i64, tpu.core_type = #tpu.core_type<tc>, window_params = [{transform_indices = @transform_0, window_bounds = array<i64: 8, 16>}, {pipeline_mode = #tpu.pipeline_mode<synchronous>, transform_indices = @transform_1, window_bounds = array<i64: 8, 4>}, {transform_indices = @transform_2, window_bounds = array<i64: 8, 16>}]} {
    %c0 = arith.constant 0 : index
    %c0_0 = arith.constant 0 : index
    %0 = vector.load %arg1[%c0, %c0_0] : memref<8x16xf32, #tpu.memory_space<vmem>>, vector<8x16xf32>
    %c0_1 = arith.constant 0 : index
    %c0_2 = arith.constant 0 : index
    %1 = vector.load %arg2[%c0_1, %c0_2] : memref<8x4xf32, #tpu.memory_space<vmem>>, vector<8x4xf32>
    %2 = vector.extract_strided_slice %1 {offsets = [0, 1], sizes = [8, 1], strides = [1, 1]} : vector<8x4xf32> to vector<8x1xf32>
    %3 = vector.broadcast %2 : vector<8x1xf32> to vector<8x16xf32>
    %4 = arith.mulf %3, %0 : vector<8x16xf32>
    %5 = vector.extract_strided_slice %1 {offsets = [0, 3], sizes = [8, 1], strides = [1, 1]} : vector<8x4xf32> to vector<8x1xf32>
    %6 = vector.broadcast %5 : vector<8x1xf32> to vector<8x16xf32>
    %7 = arith.addf %4, %6 : vector<8x16xf32>
    %8 = vector.extract_strided_slice %1 {offsets = [0, 0], sizes = [8, 1], strides = [1, 1]} : vector<8x4xf32> to vector<8x1xf32>
    %cst = arith.constant 0.000000e+00 : f32
    %9 = vector.broadcast %cst : f32 to vector<8x1xf32>
    %10 = vector.extract_strided_slice %0 {offsets = [0, 0], sizes = [8, 15], strides = [1, 1]} : vector<8x16xf32> to vector<8x15xf32>
    %11 = tpu.concatenate %9, %10 in 1 : vector<8x1xf32>, vector<8x15xf32> -> vector<8x16xf32>
    %12 = vector.broadcast %8 : vector<8x1xf32> to vector<8x16xf32>
    %13 = arith.mulf %12, %11 : vector<8x16xf32>
    %14 = arith.addf %7, %13 : vector<8x16xf32>
    %15 = vector.extract_strided_slice %1 {offsets = [0, 2], sizes = [8, 1], strides = [1, 1]} : vector<8x4xf32> to vector<8x1xf32>
    %cst_3 = arith.constant 0.000000e+00 : f32
    %16 = vector.broadcast %cst_3 : f32 to vector<8x1xf32>
    %17 = vector.extract_strided_slice %0 {offsets = [0, 1], sizes = [8, 15], strides = [1, 1]} : vector<8x16xf32> to vector<8x15xf32>
    %18 = tpu.concatenate %17, %16 in 1 : vector<8x15xf32>, vector<8x1xf32> -> vector<8x16xf32>
    %19 = vector.broadcast %15 : vector<8x1xf32> to vector<8x16xf32>
    %20 = arith.mulf %19, %18 : vector<8x16xf32>
    %21 = arith.addf %14, %20 : vector<8x16xf32>
    %c0_4 = arith.constant 0 : index
    %c0_5 = arith.constant 0 : index
    %22 = vector.load %arg3[%c0_4, %c0_5] : memref<8x16xf32, #tpu.memory_space<vmem>>, vector<8x16xf32>
    tpu.vector_store %arg3[%c0_4, %c0_5], %21 {strides = array<i32>} : memref<8x16xf32, #tpu.memory_space<vmem>>, vector<8x16xf32>,
    return
  }
  func.func @transform_0(%arg0: i32) -> (i32, i32) {
    %c0_i32 = arith.constant 0 : i32
    %c0_i32_0 = arith.constant 0 : i32
    return %arg0, %c0_i32 : i32, i32
  }
  func.func @transform_1(%arg0: i32) -> (i32, i32) {
    %c0_i32 = arith.constant 0 : i32
    %c0_i32_0 = arith.constant 0 : i32
    %c0_i32_1 = arith.constant 0 : i32
    return %c0_i32, %c0_i32_0 : i32, i32
  }
  func.func @transform_2(%arg0: i32) -> (i32, i32) {
    %c0_i32 = arith.constant 0 : i32
    %c0_i32_0 = arith.constant 0 : i32
    return %arg0, %c0_i32 : i32, i32
  }
}

</mosaic_0001>

<llo_original>
// kernel: tpu_custom_call.1
$region0: #{tpu_custom_call.1}
  #allocation0 [shape = 'u32[]', space=smem, size = 0x4, offset = 0x4, fixed_abs, tag = 'smem constant byte address 0x4 - core index']
  #allocation1 [shape = 'u32[144,128]{1,0:T(1,128)}', space=vmem, size = 0x12000, scoped, tag = 'internal scratch']
  %s0 = inlined_call_operand.hbm [shape: f32[16,16], index: 0, kind: input, shape index: {}]
  %s1 = inlined_call_operand.vmem [shape: f32[8,4], index: 1, kind: input, shape index: {}]
  %s2 = inlined_call_operand.hbm [shape: f32[16,16], index: 2, kind: output, shape index: {}]
  %s3 = sld [smem:[#allocation0]]
  $region45: #{tpu_custom_call.1} parent=0
    _
  %s5 = ssub.s32 1, %s3
  %s6 = scalar_select 0, %s5, %s3
  $region1: #{tpu_custom_call.1} parent=0
    #allocation2 [shape = 'u8[8192]{0}', space=vmem, size = 0x2000, scoped, tag = 'input window, operand 0']
    #allocation3 [shape = 's32[2]{0}', space=sflag, size = 0x8, scoped, tag = 'scoped memory for tpu_custom_call.1']
    #allocation4 [shape = 's32[2]{0}', space=sflag, size = 0x8, scoped, tag = 'scoped memory for tpu_custom_call.1']
    #allocation5 [shape = 'u8[8192]{0}', space=vmem, size = 0x2000, scoped, tag = 'output window, operand 0']
    %7 = vsyncpa [#allocation3], 0
    %s8 = scalar_lea.sflag [#allocation3], 1
    %9 = vsyncpa %s8, 0
    %10 = vsyncpa [#allocation4], 0
    %s11 = scalar_lea.sflag [#allocation4], 1
    %12 = vsyncpa %s11, 0
    loop: start=0, step=1, limit=4
    $region2: #{tpu_custom_call.1} parent=1 // loop_pre_header
      _
    $region3: #{tpu_custom_call.1} parent=1 // loop_header
      %s14 = sphi 0, %s18
      %p15 = scmp.ge.s32.totalorder %s14, 4
      %s24 = sphi 0, %s26
      %s27 = sphi 0, %s24
      %s28 = sphi 0, %s27
      %s44 = sphi 0, %s28
      %s48 = sphi 0, %s48
      %s50 = sphi 0, %s48
      %s51 = sphi 0, %s50
      %s65 = sphi 0, %s51
      %s71 = sphi 0, %s73
      %s74 = sphi 0, %s71
      %s75 = sphi 0, %s74
      %s91 = sphi 0, %s75
    $region4: #{tpu_custom_call.1} parent=1 // loop_header_branch
      %17 = sbr.rel (%p15) target = $region8
    $region5: #{tpu_custom_call.1} parent=1 // loop_body
      %s19 = ssub.s32 %s14, 1
      %s20 = ssub.s32 %s14, 2
      %s21 = sadd.s32 %s14, 1
      %s22 = ssub.s32 %s14, %s21
      %p23 = scmp.eq.s32.totalorder %s22, 0
      %s25 = sadd.s32 %s24, 1
      %s26 = scalar_select %p23, %s24, %s25
      %p29 = pneg %p23
      %p30 = scmp.eq.s32.totalorder %s14, 1
      %p31 = por %p29, %p30
      %p32 = scmp.ne.s32.totalorder %s24, %s27
      %p33 = scmp.eq.s32.totalorder %s14, 0
      %p34 = por %p32, %p33
      %p35 = scmp.ne.s32.totalorder %s24, %s27
      %p36 = scmp.eq.s32.totalorder %s19, 1
      %p37 = por %p35, %p36
      %p38 = scmp.ne.s32.totalorder %s27, %s28
      %p39 = scmp.eq.s32.totalorder %s19, 0
      %p40 = por %p38, %p39
      %p41 = scmp.ne.s32.totalorder %s27, %s28
      %p42 = scmp.eq.s32.totalorder %s20, 1
      %p43 = por %p41, %p42
      %p45 = scmp.ne.s32.totalorder %s28, %s44
      %p46 = scmp.eq.s32.totalorder %s20, 0
      %p47 = por %p45, %p46
      %s49 = sadd.s32 %s48, 1
      %p52 = scmp.eq.s32.totalorder %s14, 1
      %p53 = scmp.ne.s32.totalorder %s48, %s50
      %p54 = scmp.eq.s32.totalorder %s14, 0
      %p55 = por %p53, %p54
      %p56 = scmp.ne.s32.totalorder %s48, %s50
      %p57 = scmp.eq.s32.totalorder %s19, 1
      %p58 = por %p56, %p57
      %p59 = scmp.ne.s32.totalorder %s50, %s51
      %p60 = scmp.eq.s32.totalorder %s19, 0
      %p61 = por %p59, %p60
      %p62 = scmp.ne.s32.totalorder %s50, %s51
      %p63 = scmp.eq.s32.totalorder %s20, 1
      %p64 = por %p62, %p63
      %p66 = scmp.ne.s32.totalorder %s51, %s65
      %p67 = scmp.eq.s32.totalorder %s20, 0
      %p68 = por %p66, %p67
      %s69 = ssub.s32 %s14, %s21
      %p70 = scmp.eq.s32.totalorder %s69, 0
      %s72 = sadd.s32 %s71, 1
      %s73 = scalar_select %p70, %s71, %s72
      %p76 = pneg %p70
      %p77 = scmp.eq.s32.totalorder %s14, 1
      %p78 = por %p76, %p77
      %p79 = scmp.ne.s32.totalorder %s71, %s74
      %p80 = scmp.eq.s32.totalorder %s14, 0
      %p81 = por %p79, %p80
      %p82 = scmp.ne.s32.totalorder %s71, %s74
      %p83 = scmp.eq.s32.totalorder %s19, 1
      %p84 = por %p82, %p83
      %p85 = scmp.ne.s32.totalorder %s74, %s75
      %p86 = scmp.eq.s32.totalorder %s19, 0
      %p87 = por %p85, %p86
      %p88 = scmp.ne.s32.totalorder %s74, %s75
      %p89 = scmp.eq.s32.totalorder %s20, 1
      %p90 = por %p88, %p89
      %p92 = scmp.ne.s32.totalorder %s75, %s91
      %p93 = scmp.eq.s32.totalorder %s20, 0
      %p94 = por %p92, %p93
      %p95 = scmp.le.s32.totalorder 1, %s14
      %p96 = scmp.lt.s32.totalorder %s14, 3
      %p97 = pnand %p95, %p96
      %p98 = pneg %p97
      // Predicated region
      $region9: #{tpu_custom_call.1} parent=5 // pred_check
        _
      $region10: #{tpu_custom_call.1} parent=5 // pred_check_branch
        %100 = sbr.rel (%p97) target = $region12
      $region11: #{tpu_custom_call.1} parent=5 // pred_region
        %s101 = ssub.s32 %s14, 1
        // Predicated region
        $region13: #{tpu_custom_call.1} parent=11 // pred_check
          %p102 = pneg %p61
        $region14: #{tpu_custom_call.1} parent=11 // pred_check_branch
          %104 = sbr.rel (%p102) target = $region16
        $region15: #{tpu_custom_call.1} parent=11 // pred_region
          _
        $region16: #{tpu_custom_call.1} parent=11 // pred_fallthru
          _
      $region12: #{tpu_custom_call.1} parent=5 // pred_fallthru
        _
      %p105 = scmp.lt.s32.totalorder %s14, 2
      // Predicated region
      $region17: #{tpu_custom_call.1} parent=5 // pred_check
        %p106 = pneg %p105
      $region18: #{tpu_custom_call.1} parent=5 // pred_check_branch
        %108 = sbr.rel (%p106) target = $region20
      $region19: #{tpu_custom_call.1} parent=5 // pred_region
        // Predicated region
        $region21: #{tpu_custom_call.1} parent=19 // pred_check
          %p109 = pneg %p34
        $region22: #{tpu_custom_call.1} parent=19 // pred_check_branch
          %111 = sbr.rel (%p109) target = $region24
        $region23: #{tpu_custom_call.1} parent=19 // pred_region
          %s112 = sand.u32 %s24, 1
          %s113 = scalar_lea.sflag [#allocation3], %s112
          %s114 = sand.u32 %s24, 1
          %s115 = smul.addr %s114, 8
          %s116 = scalar_lea.vmem [#allocation2], %s115
          %s118 = ssub.s32 128, 128
          %119 = vsyncadd %s113, %s118
          %s120 = smul.addr %s14, 128
          %s121 = scalar_lea.hbm %s0, %s120
          %s123 = sshll.u32 %s116, 4
          %s124 = int_to_ptr.vmem [resolvable:$true] %s123
          %126 = dma.hbm_to_vmem [thread:$0]  %s121, 128, %s124, %s113
        $region24: #{tpu_custom_call.1} parent=19 // pred_fallthru
          _
      $region20: #{tpu_custom_call.1} parent=5 // pred_fallthru
        _
      %p127 = scmp.le.s32.totalorder 1, %s14
      %p128 = scmp.lt.s32.totalorder %s14, 3
      %p129 = pnand %p127, %p128
      %p130 = pneg %p129
      // Predicated region
      $region25: #{tpu_custom_call.1} parent=5 // pred_check
        _
      $region26: #{tpu_custom_call.1} parent=5 // pred_check_branch
        %132 = sbr.rel (%p129) target = $region28
      $region27: #{tpu_custom_call.1} parent=5 // pred_region
        %s133 = ssub.s32 %s14, 1
        %s134 = sand.u32 %s27, 1
        %s135 = scalar_lea.sflag [#allocation3], %s134
        %s136 = sand.u32 %s27, 1
        %s137 = smul.addr %s136, 8
        %s138 = scalar_lea.vmem [#allocation2], %s137
        // Predicated region
        $region29: #{tpu_custom_call.1} parent=27 // pred_check
          %p139 = pneg %p40
        $region30: #{tpu_custom_call.1} parent=27 // pred_check_branch
          %141 = sbr.rel (%p139) target = $region32
        $region31: #{tpu_custom_call.1} parent=27 // pred_region
          %142 = dma.done %s135, 128
        $region32: #{tpu_custom_call.1} parent=27 // pred_fallthru
          _
        %s143 = sand.u32 %s27, 1
        %s144 = scalar_lea.sflag [#allocation3], %s143
        %s145 = sand.u32 %s27, 1
        %s146 = smul.addr %s145, 8
        %s147 = scalar_lea.vmem [#allocation2], %s146
        %p148 = pneg %p40
        %p149 = pneg %p37
        %p150 = pneg %p61
        %p151 = pneg %p58
        %p152 = pneg %p87
        %p153 = pneg %p84
        %s154 = sand.u32 %s74, 1
        %s155 = scalar_lea.sflag [#allocation4], %s154
        %s156 = sand.u32 %s74, 1
        %s157 = smul.addr %s156, 8
        %s158 = scalar_lea.vmem [#allocation5], %s157
        %v159 = vld [vmem:[%s138] sm:$0xff]
        %v160 = vld [vmem:[%s1] sm:$0xff]
        %162 = vset.pattern.permute.xlu0 1
        %163 = vperm.xlu0 %162, %v160
        %v164 = vpop.permute.xlu0 %163
        %v166 = vmul.f32 %v164, %v159
        %167 = vset.pattern.permute.xlu0 3
        %168 = vperm.xlu0 %167, %v160
        %v169 = vpop.permute.xlu0 %168
        %v171 = vadd.f32 %v166, %v169
        %173 = vrot.lane.b32.xlu0 %v159, 1
        %v174 = vpop.permute.xlu0 %173
        %vm176 = vcmask 7168
        %v177 = vsel %vm176, 0.0, %v174
        %178 = vset.pattern.permute.xlu0 0
        %179 = vperm.xlu0 %178, %v160
        %v180 = vpop.permute.xlu0 %179
        %v182 = vmul.f32 %v180, %v177
        %v183 = vadd.f32 %v171, %v182
        %184 = vrot.lane.b32.xlu0 %v159, 127
        %v185 = vpop.permute.xlu0 %184
        %vm187 = vcmask 121856
        %v188 = vsel %vm187, %v185, 0.0
        %189 = vset.pattern.permute.xlu0 2
        %190 = vperm.xlu0 %189, %v160
        %v191 = vpop.permute.xlu0 %190
        %v193 = vmul.f32 %v191, %v188
        %v194 = vadd.f32 %v183, %v193
        %vm195 = vcmask 130048
        %196 = vst.msk [vmem:[%s158] sm:$0xff] %vm195, %v194
        %s197 = sand.u32 %s74, 1
        %s198 = scalar_lea.sflag [#allocation4], %s197
        %s199 = sand.u32 %s74, 1
        %s200 = smul.addr %s199, 8
        %s201 = scalar_lea.vmem [#allocation5], %s200
        // Predicated region
        $region33: #{tpu_custom_call.1} parent=27 // pred_check
          %p202 = pneg %p84
        $region34: #{tpu_custom_call.1} parent=27 // pred_check_branch
          %204 = sbr.rel (%p202) target = $region36
        $region35: #{tpu_custom_call.1} parent=27 // pred_region
          %s206 = ssub.s32 128, 128
          %207 = vsyncadd %s198, %s206
          %s208 = smul.addr %s19, 128
          %s209 = scalar_lea.hbm %s2, %s208
          %s211 = sshll.u32 %s201, 4
          %s212 = int_to_ptr.vmem [resolvable:$true] %s211
          %214 = dma.vmem_to_hbm [thread:$0]  %s212, 128, %s209, %s198
        $region36: #{tpu_custom_call.1} parent=27 // pred_fallthru
          _
      $region28: #{tpu_custom_call.1} parent=5 // pred_fallthru
        _
      %p215 = scmp.le.s32.totalorder 2, %s14
      // Predicated region
      $region37: #{tpu_custom_call.1} parent=5 // pred_check
        %p216 = pneg %p215
      $region38: #{tpu_custom_call.1} parent=5 // pred_check_branch
        %218 = sbr.rel (%p216) target = $region40
      $region39: #{tpu_custom_call.1} parent=5 // pred_region
        %s219 = ssub.s32 %s14, 2
        // Predicated region
        $region41: #{tpu_custom_call.1} parent=39 // pred_check
          %p220 = pneg %p90
        $region42: #{tpu_custom_call.1} parent=39 // pred_check_branch
          %222 = sbr.rel (%p220) target = $region44
        $region43: #{tpu_custom_call.1} parent=39 // pred_region
          %s223 = sand.u32 %s75, 1
          %s224 = scalar_lea.sflag [#allocation4], %s223
          %s225 = sand.u32 %s75, 1
          %s226 = smul.addr %s225, 8
          %s227 = scalar_lea.vmem [#allocation5], %s226
          %228 = dma.done %s224, 128
        $region44: #{tpu_custom_call.1} parent=39 // pred_fallthru
          _
      $region40: #{tpu_custom_call.1} parent=5 // pred_fallthru
        _
    $region6: #{tpu_custom_call.1} parent=1 // loop_footer
      %s18 = sadd.s32 1, %s14
    $region7: #{tpu_custom_call.1} parent=1 // loop_footer_branch
      %13 = sbr.rel target = $region3
    $region8: #{tpu_custom_call.1} parent=1 // loop_exit
      _
    %229 = vsyncpa [#allocation3], 1
    %s230 = scalar_lea.sflag [#allocation3], 1
    %231 = vsyncpa %s230, 1
    %232 = vsyncpa [#allocation4], 1
    %s233 = scalar_lea.sflag [#allocation4], 1
    %234 = vsyncpa %s233, 1

</llo_original>
